<compile_context>
chip_gen: v7x
topology: tpu7x:2x2x1
jax: 0.10.0
libtpu: 0.0.40
codegen_flags: <defaults>
</compile_context>

<pallas_src>
import jax
import jax.numpy as jnp
from jax.experimental import pallas as pl
from jax.experimental.pallas import tpu as pltpu


def outconv_kernel(x_ref, w_ref, b_ref, o_ref):
    # x_ref: (B_tile, Cin, tile_rows, lanes) VMEM   (lanes = 128 typically)
    # w_ref: (Cout, Cin) SMEM,  b_ref: (Cout,) SMEM
    # o_ref: (B_tile, Cout, tile_rows, lanes) VMEM
    btile = x_ref.shape[0]
    cin = x_ref.shape[1]
    cout = o_ref.shape[1]

    for b in range(btile):
        # Hoisted per-channel loads: dense (tile_rows, lanes) slabs, loaded once.
        xs = [x_ref[b, ci].astype(jnp.float32) for ci in range(cin)]

        # 1x1 conv: y[co] = sum_ci w[co, ci] * x[ci] + b[co]  (unrolled VPU FMAs).
        ys = []
        for co in range(cout):
            acc = xs[0] * w_ref[co, 0]
            for ci in range(1, cin):
                acc = acc + xs[ci] * w_ref[co, ci]
            ys.append(acc + b_ref[co])

        # Numerically stable softmax over the tiny channel axis (explicit chains).
        m = ys[0]
        for co in range(1, cout):
            m = jnp.maximum(m, ys[co])
        es = [jnp.exp(y - m) for y in ys]
        s = es[0]
        for co in range(1, cout):
            s = s + es[co]

        # EUP reciprocal seed + one Newton-Raphson refinement (no VPU divide;
        # refinement kept so channel sums stay within 1e-4 of 1.0).
        inv = pl.reciprocal(s, approx=True)
        inv = inv * (2.0 - s * inv)

        for co in range(cout):
            o_ref[b, co] = (es[co] * inv).astype(o_ref.dtype)


def _pick_tile_rows(r, target_rows):
    """Largest multiple of 8 that divides r and is <= target_rows; else full r."""
    if r <= target_rows:
        return r
    t = (min(target_rows, r) // 8) * 8
    while t >= 8:
        if r % t == 0:
            return t
        t -= 8
    return r


def _pick_batch_tile(n, per_step_elems, target_elems, cap=8):
    """Block multiple batch elements per step for small images; keep >=2 grid steps."""
    if n <= 1 or per_step_elems >= target_elems:
        return 1
    best = 1
    max_bt = min(cap, n // 2)  # n // B_tile >= 2 so both v7x TensorCores get work
    for bt in range(1, max_bt + 1):
        if n % bt == 0 and bt * per_step_elems <= target_elems:
            best = bt
    return best


def out_conv(x_nchw, weight, bias, *, target_tile_elems=131072):
    """Applies OutConv.forward: softmax(conv1x1(x), dim=1).  x_nchw: (N, Cin, H, W)."""
    N, Cin, H, W = x_nchw.shape
    Cout = weight.shape[0]
    HW = H * W

    # Fold spatial into (rows, 128) so the lane axis is always fully dense.
    if HW % 128 == 0:
        lanes = 128
        R = HW // 128
    else:
        # TODO(synk): pad spatial to a multiple of 128 upstream for such shapes;
        # this fallback is correct but uses lane-masked stores.
        lanes = HW
        R = 1

    x4 = x_nchw.reshape(N, Cin, R, lanes)                 # free view, no transpose
    w2 = weight.reshape(Cout, Cin).astype(jnp.float32)    # tiny scalar tables -> SMEM
    b1 = bias.reshape(Cout).astype(jnp.float32)

    target_rows = max(8, target_tile_elems // lanes)
    tile_rows = _pick_tile_rows(R, target_rows)
    per_step_elems = tile_rows * lanes
    b_tile = 1
    if tile_rows == R:  # image fits in one spatial tile -> block batch for more work/step
        b_tile = _pick_batch_tile(N, per_step_elems, target_tile_elems)

    grid = (N // b_tile, R // tile_rows)

    out = pl.pallas_call(
        outconv_kernel,
        out_shape=jax.ShapeDtypeStruct((N, Cout, R, lanes), x_nchw.dtype),
        grid_spec=pltpu.PrefetchScalarGridSpec(
            num_scalar_prefetch=0,
            grid=grid,
            in_specs=[
                pl.BlockSpec((b_tile, Cin, tile_rows, lanes), lambda n, s: (n, 0, s, 0)),
                pl.BlockSpec(memory_space=pltpu.MemorySpace.SMEM),
                pl.BlockSpec(memory_space=pltpu.MemorySpace.SMEM),
            ],
            out_specs=pl.BlockSpec(
                (b_tile, Cout, tile_rows, lanes), lambda n, s: (n, 0, s, 0)
            ),
        ),
        compiler_params=pltpu.CompilerParams(
            dimension_semantics=("parallel", "parallel"),
            # Double-buffered footprint at the default tile target is <~10 MiB;
            # 48 MiB gives ample headroom yet stays under v7x's 64 MiB VMEM.
            vmem_limit_bytes=48 * 1024 * 1024,
        ),
    )(x4, w2, b1)

    return out.reshape(N, Cout, H, W)


if __name__ == "__main__":
    key = jax.random.PRNGKey(0)
    k_x, k_w, k_b = jax.random.split(key, 3)

    N, Cin, H, W = 2, 4, 16, 16
    Cout = 3

    # Deterministic init mimicking nn.Conv2d default (uniform +-1/sqrt(fan_in)).
    bound = 1.0 / jnp.sqrt(jnp.float32(Cin * 1 * 1))
    weight = jax.random.uniform(k_w, (Cout, Cin, 1, 1), jnp.float32, -bound, bound)
    bias = jax.random.uniform(k_b, (Cout,), jnp.float32, -bound, bound)

    x = jax.random.normal(k_x, (N, Cin, H, W), jnp.float32)

    out = jax.block_until_ready(out_conv(x, weight, bias))

    # Sanity checks: shape and channel-softmax normalization.
    assert out.shape == (N, Cout, H, W)
    assert bool(jnp.allclose(jnp.sum(out, axis=1), 1.0, atol=1e-4))

    # Reference check against plain-JAX computation of the same math.
    ref = jnp.einsum("nchw,oc->nohw", x, weight.reshape(Cout, Cin)) + bias[None, :, None, None]
    ref = jax.nn.softmax(ref, axis=1)
    assert bool(jnp.allclose(out, ref, atol=1e-4))

    print("KERNEL_OK")
</pallas_src>

<mosaic_0001>
module attributes {stable_mosaic.version = 11 : i64} {
  func.func @outconv_kernel(%arg0: i32, %arg1: i32, %arg2: memref<1x4x2x128xf32, #tpu.memory_space<vmem>>, %arg3: memref<3x4xf32, #tpu.memory_space<smem>>, %arg4: memref<3xf32, #tpu.memory_space<smem>>, %arg5: memref<1x3x2x128xf32, #tpu.memory_space<vmem>>) attributes {dimension_semantics = [#tpu.dimension_semantics<parallel>, #tpu.dimension_semantics<parallel>], iteration_bounds = array<i64: 2, 1>, scalar_prefetch = 0 : i64, scratch_operands = 0 : i64, tpu.core_type = #tpu.core_type<tc>, window_params = [{transform_indices = @transform_0, window_bounds = array<i64: 1, 4, 2, 128>}, {transform_indices = @transform_1, window_bounds = array<i64: 3, 4>}, {transform_indices = @transform_2, window_bounds = array<i64: 3>}, {transform_indices = @transform_3, window_bounds = array<i64: 1, 3, 2, 128>}]} {
    %c0 = arith.constant 0 : index
    %c0_0 = arith.constant 0 : index
    %c0_1 = arith.constant 0 : index
    %c0_2 = arith.constant 0 : index
    %0 = vector.load %arg2[%c0, %c0_0, %c0_1, %c0_2] : memref<1x4x2x128xf32, #tpu.memory_space<vmem>>, vector<1x1x2x128xf32>
    %1 = vector.shape_cast %0 : vector<1x1x2x128xf32> to vector<2x128xf32>
    %c0_3 = arith.constant 0 : index
    %c1 = arith.constant 1 : index
    %c0_4 = arith.constant 0 : index
    %c0_5 = arith.constant 0 : index
    %2 = vector.load %arg2[%c0_3, %c1, %c0_4, %c0_5] : memref<1x4x2x128xf32, #tpu.memory_space<vmem>>, vector<1x1x2x128xf32>
    %3 = vector.shape_cast %2 : vector<1x1x2x128xf32> to vector<2x128xf32>
    %c0_6 = arith.constant 0 : index
    %c2 = arith.constant 2 : index
    %c0_7 = arith.constant 0 : index
    %c0_8 = arith.constant 0 : index
    %4 = vector.load %arg2[%c0_6, %c2, %c0_7, %c0_8] : memref<1x4x2x128xf32, #tpu.memory_space<vmem>>, vector<1x1x2x128xf32>
    %5 = vector.shape_cast %4 : vector<1x1x2x128xf32> to vector<2x128xf32>
    %c0_9 = arith.constant 0 : index
    %c3 = arith.constant 3 : index
    %c0_10 = arith.constant 0 : index
    %c0_11 = arith.constant 0 : index
    %6 = vector.load %arg2[%c0_9, %c3, %c0_10, %c0_11] : memref<1x4x2x128xf32, #tpu.memory_space<vmem>>, vector<1x1x2x128xf32>
    %7 = vector.shape_cast %6 : vector<1x1x2x128xf32> to vector<2x128xf32>
    %c0_12 = arith.constant 0 : index
    %c0_13 = arith.constant 0 : index
    %8 = memref.load %arg3[%c0_12, %c0_13] : memref<3x4xf32, #tpu.memory_space<smem>>
    %9 = vector.broadcast %8 : f32 to vector<2x128xf32>
    %10 = arith.mulf %1, %9 : vector<2x128xf32>
    %c0_14 = arith.constant 0 : index
    %c1_15 = arith.constant 1 : index
    %11 = memref.load %arg3[%c0_14, %c1_15] : memref<3x4xf32, #tpu.memory_space<smem>>
    %12 = vector.broadcast %11 : f32 to vector<2x128xf32>
    %13 = arith.mulf %3, %12 : vector<2x128xf32>
    %14 = arith.addf %10, %13 : vector<2x128xf32>
    %c0_16 = arith.constant 0 : index
    %c2_17 = arith.constant 2 : index
    %15 = memref.load %arg3[%c0_16, %c2_17] : memref<3x4xf32, #tpu.memory_space<smem>>
    %16 = vector.broadcast %15 : f32 to vector<2x128xf32>
    %17 = arith.mulf %5, %16 : vector<2x128xf32>
    %18 = arith.addf %14, %17 : vector<2x128xf32>
    %c0_18 = arith.constant 0 : index
    %c3_19 = arith.constant 3 : index
    %19 = memref.load %arg3[%c0_18, %c3_19] : memref<3x4xf32, #tpu.memory_space<smem>>
    %20 = vector.broadcast %19 : f32 to vector<2x128xf32>
    %21 = arith.mulf %7, %20 : vector<2x128xf32>
    %22 = arith.addf %18, %21 : vector<2x128xf32>
    %c0_20 = arith.constant 0 : index
    %23 = memref.load %arg4[%c0_20] : memref<3xf32, #tpu.memory_space<smem>>
    %24 = vector.broadcast %23 : f32 to vector<2x128xf32>
    %25 = arith.addf %22, %24 : vector<2x128xf32>
    %c1_21 = arith.constant 1 : index
    %c0_22 = arith.constant 0 : index
    %26 = memref.load %arg3[%c1_21, %c0_22] : memref<3x4xf32, #tpu.memory_space<smem>>
    %27 = vector.broadcast %26 : f32 to vector<2x128xf32>
    %28 = arith.mulf %1, %27 : vector<2x128xf32>
    %c1_23 = arith.constant 1 : index
    %c1_24 = arith.constant 1 : index
    %29 = memref.load %arg3[%c1_23, %c1_24] : memref<3x4xf32, #tpu.memory_space<smem>>
    %30 = vector.broadcast %29 : f32 to vector<2x128xf32>
    %31 = arith.mulf %3, %30 : vector<2x128xf32>
    %32 = arith.addf %28, %31 : vector<2x128xf32>
    %c1_25 = arith.constant 1 : index
    %c2_26 = arith.constant 2 : index
    %33 = memref.load %arg3[%c1_25, %c2_26] : memref<3x4xf32, #tpu.memory_space<smem>>
    %34 = vector.broadcast %33 : f32 to vector<2x128xf32>
    %35 = arith.mulf %5, %34 : vector<2x128xf32>
    %36 = arith.addf %32, %35 : vector<2x128xf32>
    %c1_27 = arith.constant 1 : index
    %c3_28 = arith.constant 3 : index
    %37 = memref.load %arg3[%c1_27, %c3_28] : memref<3x4xf32, #tpu.memory_space<smem>>
    %38 = vector.broadcast %37 : f32 to vector<2x128xf32>
    %39 = arith.mulf %7, %38 : vector<2x128xf32>
    %40 = arith.addf %36, %39 : vector<2x128xf32>
    %c1_29 = arith.constant 1 : index
    %41 = memref.load %arg4[%c1_29] : memref<3xf32, #tpu.memory_space<smem>>
    %42 = vector.broadcast %41 : f32 to vector<2x128xf32>
    %43 = arith.addf %40, %42 : vector<2x128xf32>
    %c2_30 = arith.constant 2 : index
    %c0_31 = arith.constant 0 : index
    %44 = memref.load %arg3[%c2_30, %c0_31] : memref<3x4xf32, #tpu.memory_space<smem>>
    %45 = vector.broadcast %44 : f32 to vector<2x128xf32>
    %46 = arith.mulf %1, %45 : vector<2x128xf32>
    %c2_32 = arith.constant 2 : index
    %c1_33 = arith.constant 1 : index
    %47 = memref.load %arg3[%c2_32, %c1_33] : memref<3x4xf32, #tpu.memory_space<smem>>
    %48 = vector.broadcast %47 : f32 to vector<2x128xf32>
    %49 = arith.mulf %3, %48 : vector<2x128xf32>
    %50 = arith.addf %46, %49 : vector<2x128xf32>
    %c2_34 = arith.constant 2 : index
    %c2_35 = arith.constant 2 : index
    %51 = memref.load %arg3[%c2_34, %c2_35] : memref<3x4xf32, #tpu.memory_space<smem>>
    %52 = vector.broadcast %51 : f32 to vector<2x128xf32>
    %53 = arith.mulf %5, %52 : vector<2x128xf32>
    %54 = arith.addf %50, %53 : vector<2x128xf32>
    %c2_36 = arith.constant 2 : index
    %c3_37 = arith.constant 3 : index
    %55 = memref.load %arg3[%c2_36, %c3_37] : memref<3x4xf32, #tpu.memory_space<smem>>
    %56 = vector.broadcast %55 : f32 to vector<2x128xf32>
    %57 = arith.mulf %7, %56 : vector<2x128xf32>
    %58 = arith.addf %54, %57 : vector<2x128xf32>
    %c2_38 = arith.constant 2 : index
    %59 = memref.load %arg4[%c2_38] : memref<3xf32, #tpu.memory_space<smem>>
    %60 = vector.broadcast %59 : f32 to vector<2x128xf32>
    %61 = arith.addf %58, %60 : vector<2x128xf32>
    %62 = arith.maximumf %25, %43 : vector<2x128xf32>
    %63 = arith.maximumf %62, %61 : vector<2x128xf32>
    %64 = arith.subf %25, %63 : vector<2x128xf32>
    %65 = math.exp %64 : vector<2x128xf32>
    %66 = arith.subf %43, %63 : vector<2x128xf32>
    %67 = math.exp %66 : vector<2x128xf32>
    %68 = arith.subf %61, %63 : vector<2x128xf32>
    %69 = math.exp %68 : vector<2x128xf32>
    %70 = arith.addf %65, %67 : vector<2x128xf32>
    %71 = arith.addf %70, %69 : vector<2x128xf32>
    %72 = tpu.reciprocal %71 {approx = true} : vector<2x128xf32> -> vector<2x128xf32>
    %73 = arith.mulf %71, %72 : vector<2x128xf32>
    %cst = arith.constant 2.000000e+00 : f32
    %74 = vector.broadcast %cst : f32 to vector<2x128xf32>
    %75 = arith.subf %74, %73 : vector<2x128xf32>
    %76 = arith.mulf %72, %75 : vector<2x128xf32>
    %77 = arith.mulf %65, %76 : vector<2x128xf32>
    %c0_39 = arith.constant 0 : index
    %c0_40 = arith.constant 0 : index
    %c0_41 = arith.constant 0 : index
    %c0_42 = arith.constant 0 : index
    %78 = vector.load %arg5[%c0_39, %c0_40, %c0_41, %c0_42] : memref<1x3x2x128xf32, #tpu.memory_space<vmem>>, vector<1x1x2x128xf32>
    %79 = vector.shape_cast %78 : vector<1x1x2x128xf32> to vector<2x128xf32>
    %80 = vector.shape_cast %77 : vector<2x128xf32> to vector<1x1x2x128xf32>
    tpu.vector_store %arg5[%c0_39, %c0_40, %c0_41, %c0_42], %80 {strides = array<i32>} : memref<1x3x2x128xf32, #tpu.memory_space<vmem>>, vector<1x1x2x128xf32>,
    %81 = arith.mulf %67, %76 : vector<2x128xf32>
    %c0_43 = arith.constant 0 : index
    %c1_44 = arith.constant 1 : index
    %c0_45 = arith.constant 0 : index
    %c0_46 = arith.constant 0 : index
    %82 = vector.load %arg5[%c0_43, %c1_44, %c0_45, %c0_46] : memref<1x3x2x128xf32, #tpu.memory_space<vmem>>, vector<1x1x2x128xf32>
    %83 = vector.shape_cast %82 : vector<1x1x2x128xf32> to vector<2x128xf32>
    %84 = vector.shape_cast %81 : vector<2x128xf32> to vector<1x1x2x128xf32>
    tpu.vector_store %arg5[%c0_43, %c1_44, %c0_45, %c0_46], %84 {strides = array<i32>} : memref<1x3x2x128xf32, #tpu.memory_space<vmem>>, vector<1x1x2x128xf32>,
    %85 = arith.mulf %69, %76 : vector<2x128xf32>
    %c0_47 = arith.constant 0 : index
    %c2_48 = arith.constant 2 : index
    %c0_49 = arith.constant 0 : index
    %c0_50 = arith.constant 0 : index
    %86 = vector.load %arg5[%c0_47, %c2_48, %c0_49, %c0_50] : memref<1x3x2x128xf32, #tpu.memory_space<vmem>>, vector<1x1x2x128xf32>
    %87 = vector.shape_cast %86 : vector<1x1x2x128xf32> to vector<2x128xf32>
    %88 = vector.shape_cast %85 : vector<2x128xf32> to vector<1x1x2x128xf32>
    tpu.vector_store %arg5[%c0_47, %c2_48, %c0_49, %c0_50], %88 {strides = array<i32>} : memref<1x3x2x128xf32, #tpu.memory_space<vmem>>, vector<1x1x2x128xf32>,
    return
  }
  func.func @transform_0(%arg0: i32, %arg1: i32) -> (i32, i32, i32, i32) {
    %c0_i32 = arith.constant 0 : i32
    %c0_i32_0 = arith.constant 0 : i32
    %c0_i32_1 = arith.constant 0 : i32
    return %arg0, %c0_i32, %arg1, %c0_i32_0 : i32, i32, i32, i32
  }
  func.func @transform_1(%arg0: i32, %arg1: i32) -> (i32, i32) {
    %c0_i32 = arith.constant 0 : i32
    %c0_i32_0 = arith.constant 0 : i32
    %c0_i32_1 = arith.constant 0 : i32
    return %c0_i32, %c0_i32_0 : i32, i32
  }
  func.func @transform_2(%arg0: i32, %arg1: i32) -> i32 {
    %c0_i32 = arith.constant 0 : i32
    %c0_i32_0 = arith.constant 0 : i32
    return %c0_i32 : i32
  }
  func.func @transform_3(%arg0: i32, %arg1: i32) -> (i32, i32, i32, i32) {
    %c0_i32 = arith.constant 0 : i32
    %c0_i32_0 = arith.constant 0 : i32
    %c0_i32_1 = arith.constant 0 : i32
    return %arg0, %c0_i32, %arg1, %c0_i32_0 : i32, i32, i32, i32
  }
}

</mosaic_0001>

<llo_original>
// kernel: tpu_custom_call.1
$region0: #{tpu_custom_call.1}
  #allocation0 [shape = 'u32[]', space=smem, size = 0x4, offset = 0x4, fixed_abs, tag = 'smem constant byte address 0x4 - core index']
  #allocation1 [shape = 'u32[144,128]{1,0:T(1,128)}', space=vmem, size = 0x12000, scoped, tag = 'internal scratch']
  %s0 = inlined_call_operand.hbm [shape: f32[2,4,2,128], index: 0, kind: input, shape index: {}]
  %s1 = inlined_call_operand.hbm [shape: f32[3,4], index: 1, kind: input, shape index: {}]
  %s2 = inlined_call_operand.vmem [shape: f32[3], index: 2, kind: input, shape index: {}]
  %s3 = inlined_call_operand.hbm [shape: f32[2,3,2,128], index: 3, kind: output, shape index: {}]
  %s4 = sld [smem:[#allocation0]]
  $region57: #{tpu_custom_call.1} parent=0
    _
  %s6 = ssub.s32 1, %s4
  %s7 = scalar_select 0, %s6, %s4
  $region1: #{tpu_custom_call.1} parent=0
    #allocation2 [shape = 'u8[8192]{0}', space=vmem, size = 0x2000, scoped, tag = 'input window, operand 0']
    #allocation3 [shape = 's32[2]{0}', space=sflag, size = 0x8, scoped, tag = 'scoped memory for tpu_custom_call.1']
    #allocation4 [shape = 's32[2]{0}', space=sflag, size = 0x8, scoped, tag = 'scoped memory for tpu_custom_call.1']
    #allocation5 [shape = 's32[2]{0}', space=sflag, size = 0x8, scoped, tag = 'scoped memory for tpu_custom_call.1']
    #allocation6 [shape = 's32[2]{0}', space=sflag, size = 0x8, scoped, tag = 'scoped memory for tpu_custom_call.1']
    #allocation7 [shape = 'u8[2048]{0}', space=smem, size = 0x800, scoped, tag = 'input window, operand 1, single buffered']
    #allocation8 [shape = 'u8[512]{0}', space=smem, size = 0x200, scoped, tag = 'input window, operand 2, single buffered']
    #allocation9 [shape = 'u8[6144]{0}', space=vmem, size = 0x1800, scoped, tag = 'output window, operand 0']
    %8 = vsyncpa [#allocation3], 0
    %s9 = scalar_lea.sflag [#allocation3], 1
    %10 = vsyncpa %s9, 0
    %11 = vsyncpa [#allocation5], 0
    %12 = vsyncpa [#allocation6], 0
    %13 = vsyncpa [#allocation4], 0
    %s14 = scalar_lea.sflag [#allocation4], 1
    %15 = vsyncpa %s14, 0
    loop: start=0, step=1, limit=4
    $region2: #{tpu_custom_call.1} parent=1 // loop_pre_header
      _
    $region3: #{tpu_custom_call.1} parent=1 // loop_header
      %s17 = sphi 0, %s21
      %p18 = scmp.ge.s32.totalorder %s17, 4
      %s24 = sphi 0, %s36
      %s25 = sphi 0, %s32
      %s26 = sphi 0, %s24
      %s27 = sphi 0, %s25
      %s28 = sphi 0, %s26
      %s29 = sphi 0, %s27
      %s41 = sphi 0, %s43
      %s44 = sphi 0, %s41
      %s45 = sphi 0, %s44
      %s61 = sphi 0, %s45
      %s65 = sphi 0, %s65
      %s67 = sphi 0, %s65
      %s68 = sphi 0, %s67
      %s82 = sphi 0, %s68
      %s86 = sphi 0, %s86
      %s88 = sphi 0, %s86
      %s89 = sphi 0, %s88
      %s103 = sphi 0, %s89
      %s111 = sphi 0, %s113
      %s114 = sphi 0, %s111
      %s115 = sphi 0, %s114
      %s131 = sphi 0, %s115
    $region4: #{tpu_custom_call.1} parent=1 // loop_header_branch
      %20 = sbr.rel (%p18) target = $region8
    $region5: #{tpu_custom_call.1} parent=1 // loop_body
      %s22 = ssub.s32 %s17, 1
      %s23 = ssub.s32 %s17, 2
      %s30 = sadd.s32 1, %s25
      %p31 = scmp.ge.s32.totalorder %s30, 1
      %s32 = scalar_select %p31, 0, %s30
      %s33 = sadd.s32 1, %s24
      %s34 = scalar_select %p31, %s33, %s24
      %p35 = scmp.ge.s32.totalorder %s34, 2
      %s36 = scalar_select %p35, 0, %s34
      %s37 = ssub.s32 %s24, %s36
      %s38 = ssub.s32 %s25, %s32
      %s39 = sor.u32 %s37, %s38
      %p40 = scmp.eq.s32.totalorder %s39, 0
      %s42 = sadd.s32 %s41, 1
      %s43 = scalar_select %p40, %s41, %s42
      %p46 = pneg %p40
      %p47 = scmp.eq.s32.totalorder %s17, 1
      %p48 = por %p46, %p47
      %p49 = scmp.ne.s32.totalorder %s41, %s44
      %p50 = scmp.eq.s32.totalorder %s17, 0
      %p51 = por %p49, %p50
      %p52 = scmp.ne.s32.totalorder %s41, %s44
      %p53 = scmp.eq.s32.totalorder %s22, 1
      %p54 = por %p52, %p53
      %p55 = scmp.ne.s32.totalorder %s44, %s45
      %p56 = scmp.eq.s32.totalorder %s22, 0
      %p57 = por %p55, %p56
      %p58 = scmp.ne.s32.totalorder %s44, %s45
      %p59 = scmp.eq.s32.totalorder %s23, 1
      %p60 = por %p58, %p59
      %p62 = scmp.ne.s32.totalorder %s45, %s61
      %p63 = scmp.eq.s32.totalorder %s23, 0
      %p64 = por %p62, %p63
      %s66 = sadd.s32 %s65, 1
      %p69 = scmp.eq.s32.totalorder %s17, 1
      %p70 = scmp.ne.s32.totalorder %s65, %s67
      %p71 = scmp.eq.s32.totalorder %s17, 0
      %p72 = por %p70, %p71
      %p73 = scmp.ne.s32.totalorder %s65, %s67
      %p74 = scmp.eq.s32.totalorder %s22, 1
      %p75 = por %p73, %p74
      %p76 = scmp.ne.s32.totalorder %s67, %s68
      %p77 = scmp.eq.s32.totalorder %s22, 0
      %p78 = por %p76, %p77
      %p79 = scmp.ne.s32.totalorder %s67, %s68
      %p80 = scmp.eq.s32.totalorder %s23, 1
      %p81 = por %p79, %p80
      %p83 = scmp.ne.s32.totalorder %s68, %s82
      %p84 = scmp.eq.s32.totalorder %s23, 0
      %p85 = por %p83, %p84
      %s87 = sadd.s32 %s86, 1
      %p90 = scmp.eq.s32.totalorder %s17, 1
      %p91 = scmp.ne.s32.totalorder %s86, %s88
      %p92 = scmp.eq.s32.totalorder %s17, 0
      %p93 = por %p91, %p92
      %p94 = scmp.ne.s32.totalorder %s86, %s88
      %p95 = scmp.eq.s32.totalorder %s22, 1
      %p96 = por %p94, %p95
      %p97 = scmp.ne.s32.totalorder %s88, %s89
      %p98 = scmp.eq.s32.totalorder %s22, 0
      %p99 = por %p97, %p98
      %p100 = scmp.ne.s32.totalorder %s88, %s89
      %p101 = scmp.eq.s32.totalorder %s23, 1
      %p102 = por %p100, %p101
      %p104 = scmp.ne.s32.totalorder %s89, %s103
      %p105 = scmp.eq.s32.totalorder %s23, 0
      %p106 = por %p104, %p105
      %s107 = ssub.s32 %s24, %s36
      %s108 = ssub.s32 %s25, %s32
      %s109 = sor.u32 %s107, %s108
      %p110 = scmp.eq.s32.totalorder %s109, 0
      %s112 = sadd.s32 %s111, 1
      %s113 = scalar_select %p110, %s111, %s112
      %p116 = pneg %p110
      %p117 = scmp.eq.s32.totalorder %s17, 1
      %p118 = por %p116, %p117
      %p119 = scmp.ne.s32.totalorder %s111, %s114
      %p120 = scmp.eq.s32.totalorder %s17, 0
      %p121 = por %p119, %p120
      %p122 = scmp.ne.s32.totalorder %s111, %s114
      %p123 = scmp.eq.s32.totalorder %s22, 1
      %p124 = por %p122, %p123
      %p125 = scmp.ne.s32.totalorder %s114, %s115
      %p126 = scmp.eq.s32.totalorder %s22, 0
      %p127 = por %p125, %p126
      %p128 = scmp.ne.s32.totalorder %s114, %s115
      %p129 = scmp.eq.s32.totalorder %s23, 1
      %p130 = por %p128, %p129
      %p132 = scmp.ne.s32.totalorder %s115, %s131
      %p133 = scmp.eq.s32.totalorder %s23, 0
      %p134 = por %p132, %p133
      %p135 = scmp.le.s32.totalorder 1, %s17
      %p136 = scmp.lt.s32.totalorder %s17, 3
      %p137 = pnand %p135, %p136
      %p138 = pneg %p137
      // Predicated region
      $region9: #{tpu_custom_call.1} parent=5 // pred_check
        _
      $region10: #{tpu_custom_call.1} parent=5 // pred_check_branch
        %140 = sbr.rel (%p137) target = $region12
      $region11: #{tpu_custom_call.1} parent=5 // pred_region
        %s141 = ssub.s32 %s17, 1
        // Predicated region
        $region13: #{tpu_custom_call.1} parent=11 // pred_check
          %p142 = pneg %p78
        $region14: #{tpu_custom_call.1} parent=11 // pred_check_branch
          %144 = sbr.rel (%p142) target = $region16
        $region15: #{tpu_custom_call.1} parent=11 // pred_region
          %s146 = ssub.s32 64, 64
          %147 = vsyncadd [#allocation5], %s146
          %150 = dma.hbm_to_smem %s1, 64, [#allocation7], [#allocation5]
        $region16: #{tpu_custom_call.1} parent=11 // pred_fallthru
          _
        // Predicated region
        $region17: #{tpu_custom_call.1} parent=11 // pred_check
          %p151 = pneg %p99
        $region18: #{tpu_custom_call.1} parent=11 // pred_check_branch
          %153 = sbr.rel (%p151) target = $region20
        $region19: #{tpu_custom_call.1} parent=11 // pred_region
          %s155 = ssub.s32 16, 16
          %156 = vsyncadd [#allocation6], %s155
          %s158 = sshll.u32 %s2, 4
          %s159 = int_to_ptr.vmem [resolvable:$true] %s158
          %161 = dma.vmem_to_smem %s159, 16, [#allocation8], [#allocation6]
        $region20: #{tpu_custom_call.1} parent=11 // pred_fallthru
          _
      $region12: #{tpu_custom_call.1} parent=5 // pred_fallthru
        _
      %p162 = scmp.lt.s32.totalorder %s17, 2
      // Predicated region
      $region21: #{tpu_custom_call.1} parent=5 // pred_check
        %p163 = pneg %p162
      $region22: #{tpu_custom_call.1} parent=5 // pred_check_branch
        %165 = sbr.rel (%p163) target = $region24
      $region23: #{tpu_custom_call.1} parent=5 // pred_region
        // Predicated region
        $region25: #{tpu_custom_call.1} parent=23 // pred_check
          %p166 = pneg %p51
        $region26: #{tpu_custom_call.1} parent=23 // pred_check_branch
          %168 = sbr.rel (%p166) target = $region28
        $region27: #{tpu_custom_call.1} parent=23 // pred_region
          %s169 = sand.u32 %s41, 1
          %s170 = scalar_lea.sflag [#allocation3], %s169
          %s171 = sand.u32 %s41, 1
          %s172 = smul.addr %s171, 8
          %s173 = scalar_lea.vmem [#allocation2], %s172
          %s175 = ssub.s32 128, 128
          %176 = vsyncadd %s170, %s175
          %s177 = smul.addr %s24, 4
          %s178 = sadd.s32 %s25, %s177
          %s179 = smul.addr %s178, 32
          %s180 = scalar_lea.hbm %s0, %s179
          %s181 = sshll.u32 %s173, 4
          %s182 = int_to_ptr.vmem [resolvable:$true] %s181
          %187 = dma.hbm_to_vmem [thread:$0]  %s180, 128, %s182, %s170, 32, 32, 2
        $region28: #{tpu_custom_call.1} parent=23 // pred_fallthru
          _
      $region24: #{tpu_custom_call.1} parent=5 // pred_fallthru
        _
      %p188 = scmp.le.s32.totalorder 1, %s17
      %p189 = scmp.lt.s32.totalorder %s17, 3
      %p190 = pnand %p188, %p189
      %p191 = pneg %p190
      // Predicated region
      $region29: #{tpu_custom_call.1} parent=5 // pred_check
        _
      $region30: #{tpu_custom_call.1} parent=5 // pred_check_branch
        %193 = sbr.rel (%p190) target = $region32
      $region31: #{tpu_custom_call.1} parent=5 // pred_region
        %s194 = ssub.s32 %s17, 1
        %s195 = sand.u32 %s44, 1
        %s196 = scalar_lea.sflag [#allocation3], %s195
        %s197 = sand.u32 %s44, 1
        %s198 = smul.addr %s197, 8
        %s199 = scalar_lea.vmem [#allocation2], %s198
        // Predicated region
        $region33: #{tpu_custom_call.1} parent=31 // pred_check
          %p200 = pneg %p57
        $region34: #{tpu_custom_call.1} parent=31 // pred_check_branch
          %202 = sbr.rel (%p200) target = $region36
        $region35: #{tpu_custom_call.1} parent=31 // pred_region
          %203 = dma.done %s196, 128
        $region36: #{tpu_custom_call.1} parent=31 // pred_fallthru
          _
        // Predicated region
        $region37: #{tpu_custom_call.1} parent=31 // pred_check
          %p204 = pneg %p78
        $region38: #{tpu_custom_call.1} parent=31 // pred_check_branch
          %206 = sbr.rel (%p204) target = $region40
        $region39: #{tpu_custom_call.1} parent=31 // pred_region
          %207 = dma.done [#allocation5], 64
        $region40: #{tpu_custom_call.1} parent=31 // pred_fallthru
          _
        // Predicated region
        $region41: #{tpu_custom_call.1} parent=31 // pred_check
          %p208 = pneg %p99
        $region42: #{tpu_custom_call.1} parent=31 // pred_check_branch
          %210 = sbr.rel (%p208) target = $region44
        $region43: #{tpu_custom_call.1} parent=31 // pred_region
          %211 = dma.done [#allocation6], 16
        $region44: #{tpu_custom_call.1} parent=31 // pred_fallthru
          _
        %212 = sfence
        %s213 = sand.u32 %s44, 1
        %s214 = scalar_lea.sflag [#allocation3], %s213
        %s215 = sand.u32 %s44, 1
        %s216 = smul.addr %s215, 8
        %s217 = scalar_lea.vmem [#allocation2], %s216
        %p218 = pneg %p57
        %p219 = pneg %p54
        %p220 = pneg %p78
        %p221 = pneg %p75
        %p222 = pneg %p99
        %p223 = pneg %p96
        %p224 = pneg %p127
        %p225 = pneg %p124
        %s226 = sand.u32 %s114, 1
        %s227 = scalar_lea.sflag [#allocation4], %s226
        %s228 = sand.u32 %s114, 1
        %s229 = smul.addr %s228, 6
        %s230 = scalar_lea.vmem [#allocation9], %s229
        %v231 = vld [vmem:[%s199] sm:$0x3]
        %s232 = scalar_lea.vmem %s199, 2 [#allocation2]
        %v233 = vld [vmem:[%s232] sm:$0x3]
        %s234 = scalar_lea.vmem %s199, 4 [#allocation2]
        %v235 = vld [vmem:[%s234] sm:$0x3]
        %s236 = scalar_lea.vmem %s199, 6 [#allocation2]
        %v237 = vld [vmem:[%s236] sm:$0x3]
        %s238 = sld [smem:[#allocation7]]
        %v239 = vstv %s238
        %v240 = vmul.f32 %v231, %v239
        %s241 = sld [smem:[#allocation7 + $0x1]]
        %v242 = vstv %s241
        %v243 = vmul.f32 %v233, %v242
        %v244 = vadd.f32 %v240, %v243
        %s245 = sld [smem:[#allocation7 + $0x2]]
        %v246 = vstv %s245
        %v247 = vmul.f32 %v235, %v246
        %v248 = vadd.f32 %v244, %v247
        %s249 = sld [smem:[#allocation7 + $0x3]]
        %v250 = vstv %s249
        %v251 = vmul.f32 %v237, %v250
        %v252 = vadd.f32 %v248, %v251
        %s253 = sld [smem:[#allocation8]]
        %v254 = vstv %s253
        %v255 = vadd.f32 %v252, %v254
        %s256 = sld [smem:[#allocation7 + $0x80]]
        %v257 = vstv %s256
        %v258 = vmul.f32 %v231, %v257
        %s259 = sld [smem:[#allocation7 + $0x81]]
        %v260 = vstv %s259
        %v261 = vmul.f32 %v233, %v260
        %v262 = vadd.f32 %v258, %v261
        %s263 = sld [smem:[#allocation7 + $0x82]]
        %v264 = vstv %s263
        %v265 = vmul.f32 %v235, %v264
        %v266 = vadd.f32 %v262, %v265
        %s267 = sld [smem:[#allocation7 + $0x83]]
        %v268 = vstv %s267
        %v269 = vmul.f32 %v237, %v268
        %v270 = vadd.f32 %v266, %v269
        %s271 = sld [smem:[#allocation8 + $0x1]]
        %v272 = vstv %s271
        %v273 = vadd.f32 %v270, %v272
        %s274 = sld [smem:[#allocation7 + $0x100]]
        %v275 = vstv %s274
        %v276 = vmul.f32 %v231, %v275
        %s277 = sld [smem:[#allocation7 + $0x101]]
        %v278 = vstv %s277
        %v279 = vmul.f32 %v233, %v278
        %v280 = vadd.f32 %v276, %v279
        %s281 = sld [smem:[#allocation7 + $0x102]]
        %v282 = vstv %s281
        %v283 = vmul.f32 %v235, %v282
        %v284 = vadd.f32 %v280, %v283
        %s285 = sld [smem:[#allocation7 + $0x103]]
        %v286 = vstv %s285
        %v287 = vmul.f32 %v237, %v286
        %v288 = vadd.f32 %v284, %v287
        %s289 = sld [smem:[#allocation8 + $0x2]]
        %v290 = vstv %s289
        %v291 = vadd.f32 %v288, %v290
        %v292 = vmax.f32 %v255, %v273
        %v293 = vmax.f32 %v292, %v291
        %v294 = vsub.f32 %v255, %v293
        %v295 = vmul.f32 %v294, 1.442695
        %v296 = vpow.pop %v295
        %v297 = vsub.f32 %v273, %v293
        %v298 = vmul.f32 %v297, 1.442695
        %v299 = vpow.pop %v298
        %v300 = vsub.f32 %v291, %v293
        %v301 = vmul.f32 %v300, 1.442695
        %v302 = vpow.pop %v301
        %v303 = vadd.f32 %v296, %v299
        %v304 = vadd.f32 %v303, %v302
        %v305 = vrcp.pop %v304
        %v306 = vmul.f32 %v304, %v305
        %v307 = vsub.f32 2.0, %v306
        %v308 = vmul.f32 %v305, %v307
        %v309 = vmul.f32 %v296, %v308
        %310 = vst [vmem:[%s230] sm:$0x3] %v309
        %v311 = vmul.f32 %v299, %v308
        %s312 = scalar_lea.vmem %s230, 2 [#allocation9]
        %313 = vst [vmem:[%s312] sm:$0x3] %v311
        %v314 = vmul.f32 %v302, %v308
        %s315 = scalar_lea.vmem %s230, 4 [#allocation9]
        %316 = vst [vmem:[%s315] sm:$0x3] %v314
        %s317 = sand.u32 %s114, 1
        %s318 = scalar_lea.sflag [#allocation4], %s317
        %s319 = sand.u32 %s114, 1
        %s320 = smul.addr %s319, 6
        %s321 = scalar_lea.vmem [#allocation9], %s320
        // Predicated region
        $region45: #{tpu_custom_call.1} parent=31 // pred_check
          %p322 = pneg %p124
        $region46: #{tpu_custom_call.1} parent=31 // pred_check_branch
          %324 = sbr.rel (%p322) target = $region48
        $region47: #{tpu_custom_call.1} parent=31 // pred_region
          %s326 = ssub.s32 96, 96
          %327 = vsyncadd %s318, %s326
          %s328 = smul.addr %s26, 3
          %s329 = sadd.s32 %s27, %s328
          %s330 = smul.addr %s329, 32
          %s331 = scalar_lea.hbm %s3, %s330
          %s332 = sshll.u32 %s321, 4
          %s333 = int_to_ptr.vmem [resolvable:$true] %s332
          %338 = dma.vmem_to_hbm [thread:$0]  %s333, 96, %s331, %s318, 32, 32, 2
        $region48: #{tpu_custom_call.1} parent=31 // pred_fallthru
          _
      $region32: #{tpu_custom_call.1} parent=5 // pred_fallthru
        _
      %p339 = scmp.le.s32.totalorder 2, %s17
      // Predicated region
      $region49: #{tpu_custom_call.1} parent=5 // pred_check
        %p340 = pneg %p339
      $region50: #{tpu_custom_call.1} parent=5 // pred_check_branch
        %342 = sbr.rel (%p340) target = $region52
      $region51: #{tpu_custom_call.1} parent=5 // pred_region
        %s343 = ssub.s32 %s17, 2
        // Predicated region
        $region53: #{tpu_custom_call.1} parent=51 // pred_check
          %p344 = pneg %p130
        $region54: #{tpu_custom_call.1} parent=51 // pred_check_branch
          %346 = sbr.rel (%p344) target = $region56
        $region55: #{tpu_custom_call.1} parent=51 // pred_region
          %s347 = sand.u32 %s115, 1
          %s348 = scalar_lea.sflag [#allocation4], %s347
          %s349 = sand.u32 %s115, 1
          %s350 = smul.addr %s349, 6
          %s351 = scalar_lea.vmem [#allocation9], %s350
          %352 = dma.done %s348, 96
        $region56: #{tpu_custom_call.1} parent=51 // pred_fallthru
          _
      $region52: #{tpu_custom_call.1} parent=5 // pred_fallthru
        _
    $region6: #{tpu_custom_call.1} parent=1 // loop_footer
      %s21 = sadd.s32 1, %s17
    $region7: #{tpu_custom_call.1} parent=1 // loop_footer_branch
      %16 = sbr.rel target = $region3
    $region8: #{tpu_custom_call.1} parent=1 // loop_exit
      _
    %353 = vsyncpa [#allocation3], 1
    %s354 = scalar_lea.sflag [#allocation3], 1
    %355 = vsyncpa %s354, 1
    %356 = vsyncpa [#allocation4], 1
    %s357 = scalar_lea.sflag [#allocation4], 1
    %358 = vsyncpa %s357, 1
    %359 = vsyncpa [#allocation5], 1
    %s360 = scalar_lea.sflag [#allocation5], 1
    %361 = vsyncpa %s360, 1
    %362 = vsyncpa [#allocation6], 1
    %s363 = scalar_lea.sflag [#allocation6], 1
    %364 = vsyncpa %s363, 1

</llo_original>
